<compile_context>
chip_gen: v7x
topology: tpu7x:2x2x1
jax: 0.10.0
libtpu: 0.0.40
codegen_flags: <defaults>
</compile_context>

<pallas_src>
import functools

import jax
import jax.numpy as jnp
from jax.experimental import pallas as pl
from jax.experimental.pallas import tpu as pltpu


def _gdn_kernel(x_ref, g_ref, b_ref, o_ref, *, inverse, use_mxu,
                keep_bf16, mxu_bf16):
    # x_ref: (1, C, TS) tile  -- channels on sublanes, spatial on lanes.
    # g_ref: (C, C) effective gamma (reparameterized, resident in VMEM, f32).
    # b_ref: (C, 1) effective beta (f32).
    x = x_ref[0]
    if not keep_bf16:
        x = x.astype(jnp.float32)
    x2 = x * x                                            # (C, TS), VPU
    C, ts = g_ref.shape[0], x.shape[-1]

    if use_mxu:
        g = g_ref[...]
        a = x2
        if mxu_bf16 or keep_bf16:
            g = g.astype(jnp.bfloat16)
            a = a.astype(jnp.bfloat16)
        norm = jnp.dot(g, a, preferred_element_type=jnp.float32) + b_ref[...]
    else:
        # Tiny C: C-step broadcast-FMA chain on the VPU; skips the MXU (which
        # would pad the (C,C)@(C,TS) matmul out to 128/256 lanes).
        x2f = x2.astype(jnp.float32)
        norm = jnp.broadcast_to(b_ref[...], (C, ts))
        for j in range(C):
            norm = norm + g_ref[:, j:j + 1] * x2f[j:j + 1, :]

    scale = jnp.sqrt(norm) if inverse else jax.lax.rsqrt(norm)   # single EUP op
    if keep_bf16:
        scale = scale.astype(x.dtype)
    o_ref[0] = (x * scale).astype(o_ref.dtype)


def _round_up(n, m):
    return ((n + m - 1) // m) * m


def _tpu_vmem_and_kind():
    kind = ""
    try:
        kind = jax.devices()[0].device_kind.lower()
    except Exception:
        pass
    vmem = None
    try:
        vmem = int(pltpu.get_tpu_info().vmem_capacity_bytes)
    except Exception:
        vmem = None
    if vmem is None or vmem <= 0:
        vmem = 64 * 1024 * 1024 if "v7" in kind else 128 * 1024 * 1024
    return vmem, kind


def gdn_forward(x, gamma, beta, *,
                beta_min=1e-6, reparam_offset=2.0 ** (-18),
                inverse=False, tile_s=None, mxu_bf16=None):
    """GDN forward.  x: [B, C, H, W] (or [B, C, D, W, H]); gamma: [C, C]; beta: [C]."""
    orig_shape = x.shape
    if x.ndim == 5:                       # "unfold" branch of the PyTorch module
        bs, ch, d, w, h = x.shape
        x = x.reshape(bs, ch, d * w, h)
    B, C, H, W = x.shape
    S = H * W

    pedestal = reparam_offset ** 2
    beta_bound = (beta_min + pedestal) ** 0.5
    gamma_bound = reparam_offset

    # Effective (reparameterized) parameters, computed once outside the kernel.
    g_eff = jnp.maximum(gamma.astype(jnp.float32), gamma_bound) ** 2 - pedestal
    b_eff = jnp.maximum(beta.astype(jnp.float32), beta_bound) ** 2 - pedestal
    b_eff = b_eff.reshape(C, 1)

    # NCHW -> (B, C, H*W): contiguous merge, no transpose / extra HBM traffic.
    x3 = x.reshape(B, C, S)

    # ---- Generation-aware tile / VMEM sizing --------------------------------
    vmem_phys, kind = _tpu_vmem_and_kind()
    is_v5 = "v5" in kind
    # ~51 MiB ceiling on 64-MiB v7x, 100 MiB on 128-MiB v5e/v6e (headroom kept).
    vmem_cap = min(int(vmem_phys * 0.80), 100 * 1024 * 1024)

    itemsize = jnp.dtype(x.dtype).itemsize
    keep_bf16 = (x.dtype == jnp.bfloat16) and not is_v5
    use_mxu = C > 8
    if mxu_bf16 is None:
        mxu_bf16 = bool(is_v5 and C >= 128 and use_mxu)
    compute_itemsize = 2 if keep_bf16 else 4

    # Per spatial lane: 2x double-buffered input + 2x output tile columns,
    # plus in-kernel intermediates (x / x^2 at compute precision, norm in f32).
    per_lane = C * (4 * itemsize + 2 * compute_itemsize + 4)
    fixed = 2 * (C * C + C) * 4 + (1 << 20)            # gamma/beta (dbl-buf) + slack
    budget_ts = max(128, ((vmem_cap - fixed) // max(per_lane, 1)) // 128 * 128)

    default_cap = 4096 if vmem_phys <= 64 * 1024 * 1024 else 8192
    ts = int(tile_s) if tile_s is not None else default_cap
    ts = min(ts, budget_ts, _round_up(S, 128))
    ts = max(128, (ts // 128) * 128)
    # Keep >=4 grid steps so both v7x TensorCores get work (harmless elsewhere).
    while ts >= 2048 and B * pl.cdiv(S, ts) < 4:
        ts //= 2

    num_s = pl.cdiv(S, ts)                # ragged last tile handled by Pallas
    grid = (B, num_s)
    vmem_limit = int(min(vmem_cap, max(fixed + 2 * per_lane * ts, 16 * 1024 * 1024)))

    cost = pl.CostEstimate(
        flops=2 * B * S * C * C + 4 * B * S * C,
        transcendentals=B * S * C,
        bytes_accessed=2 * B * S * C * itemsize + (C * C + C) * 4,
    )

    out3 = pl.pallas_call(
        functools.partial(_gdn_kernel, inverse=inverse, use_mxu=use_mxu,
                          keep_bf16=keep_bf16, mxu_bf16=mxu_bf16),
        out_shape=jax.ShapeDtypeStruct((B, C, S), x.dtype),
        grid_spec=pltpu.PrefetchScalarGridSpec(
            num_scalar_prefetch=0,
            grid=grid,
            in_specs=[
                pl.BlockSpec((1, C, ts), lambda b, s: (b, 0, s)),  # x tile
                pl.BlockSpec((C, C), lambda b, s: (0, 0)),          # gamma (resident)
                pl.BlockSpec((C, 1), lambda b, s: (0, 0)),          # beta  (resident)
            ],
            out_specs=pl.BlockSpec((1, C, ts), lambda b, s: (b, 0, s)),
        ),
        compiler_params=pltpu.CompilerParams(
            dimension_semantics=("parallel", "parallel"),
            vmem_limit_bytes=vmem_limit,
        ),
        cost_estimate=cost,
    )(x3, g_eff, b_eff)

    out = out3.reshape(B, C, H, W)
    if len(orig_shape) == 5:
        out = out.reshape(orig_shape)
    return out


def init_gdn_params(ch, gamma_init=0.1, reparam_offset=2.0 ** (-18)):
    """Deterministic parameter init matching GDN.build()."""
    pedestal = reparam_offset ** 2
    beta = jnp.sqrt(jnp.ones((ch,), jnp.float32) + pedestal)
    g = gamma_init * jnp.eye(ch, dtype=jnp.float32) + pedestal
    gamma = jnp.sqrt(g)
    return gamma, beta


def gdn_reference(x, gamma, beta, *, beta_min=1e-6,
                  reparam_offset=2.0 ** (-18), inverse=False):
    """Pure-JAX reference (4-D NCHW) for verification."""
    pedestal = reparam_offset ** 2
    beta_bound = (beta_min + pedestal) ** 0.5
    gamma_bound = reparam_offset
    b = jnp.maximum(beta, beta_bound) ** 2 - pedestal
    g = jnp.maximum(gamma, gamma_bound) ** 2 - pedestal
    norm = jnp.einsum("ij,bjhw->bihw", g, x * x) + b[None, :, None, None]
    norm = jnp.sqrt(norm)
    return x * norm if inverse else x / norm


if __name__ == "__main__":
    key = jax.random.PRNGKey(0)
    B, C, H, W = 2, 4, 16, 16
    x = jax.random.normal(key, (B, C, H, W), dtype=jnp.float32)
    gamma, beta = init_gdn_params(C)

    # Forward GDN.
    out = jax.block_until_ready(gdn_forward(x, gamma, beta, inverse=False))
    ref = gdn_reference(x, gamma, beta, inverse=False)
    assert out.shape == x.shape and out.dtype == x.dtype
    assert jnp.allclose(out, ref, atol=1e-5, rtol=1e-5), "forward GDN mismatch"

    # Inverse GDN (IGDN).
    out_i = jax.block_until_ready(gdn_forward(x, gamma, beta, inverse=True))
    ref_i = gdn_reference(x, gamma, beta, inverse=True)
    assert jnp.allclose(out_i, ref_i, atol=1e-5, rtol=1e-5), "inverse GDN mismatch"

    # 5-D "unfold" branch: view (bs, ch, d, w, h) as (bs, ch, d*w, h).
    x5 = jax.random.normal(jax.random.PRNGKey(1), (2, C, 4, 4, 8), jnp.float32)
    out5 = jax.block_until_ready(gdn_forward(x5, gamma, beta, inverse=False))
    ref5 = gdn_reference(x5.reshape(2, C, 16, 8), gamma, beta,
                         inverse=False).reshape(x5.shape)
    assert jnp.allclose(out5, ref5, atol=1e-5, rtol=1e-5), "5-D GDN mismatch"

    print("KERNEL_OK")
</pallas_src>

<mosaic_0001>
module attributes {stable_mosaic.version = 11 : i64} {
  func.func @_gdn_kernel(%arg0: i32, %arg1: i32, %arg2: memref<1x4x256xf32, #tpu.memory_space<vmem>>, %arg3: memref<4x4xf32, #tpu.memory_space<vmem>>, %arg4: memref<4x1xf32, #tpu.memory_space<vmem>>, %arg5: memref<1x4x256xf32, #tpu.memory_space<vmem>>) attributes {dimension_semantics = [#tpu.dimension_semantics<parallel>, #tpu.dimension_semantics<parallel>], iteration_bounds = array<i64: 2, 1>, scalar_prefetch = 0 : i64, scratch_operands = 0 : i64, tpu.core_type = #tpu.core_type<tc>, window_params = [{transform_indices = @transform_0, window_bounds = array<i64: 1, 4, 256>}, {pipeline_mode = #tpu.pipeline_mode<synchronous>, transform_indices = @transform_1, window_bounds = array<i64: 4, 4>}, {pipeline_mode = #tpu.pipeline_mode<synchronous>, transform_indices = @transform_2, window_bounds = array<i64: 4, 1>}, {transform_indices = @transform_3, window_bounds = array<i64: 1, 4, 256>}]} {
    %c0 = arith.constant 0 : index
    %c0_0 = arith.constant 0 : index
    %c0_1 = arith.constant 0 : index
    %0 = vector.load %arg2[%c0, %c0_0, %c0_1] : memref<1x4x256xf32, #tpu.memory_space<vmem>>, vector<1x4x256xf32>
    %1 = vector.shape_cast %0 : vector<1x4x256xf32> to vector<4x256xf32>
    %2 = arith.mulf %1, %1 : vector<4x256xf32>
    %c0_2 = arith.constant 0 : index
    %c0_3 = arith.constant 0 : index
    %3 = vector.load %arg4[%c0_2, %c0_3] : memref<4x1xf32, #tpu.memory_space<vmem>>, vector<4x1xf32>
    %4 = vector.shape_cast %3 : vector<4x1xf32> to vector<4x1xf32>
    %5 = vector.broadcast %4 : vector<4x1xf32> to vector<4x256xf32>
    %c0_4 = arith.constant 0 : index
    %c0_5 = arith.constant 0 : index
    %6 = vector.load %arg3[%c0_4, %c0_5] : memref<4x4xf32, #tpu.memory_space<vmem>>, vector<4x1xf32>
    %7 = vector.extract_strided_slice %2 {offsets = [0, 0], sizes = [1, 256], strides = [1, 1]} : vector<4x256xf32> to vector<1x256xf32>
    %8 = vector.broadcast %6 : vector<4x1xf32> to vector<4x256xf32>
    %9 = vector.broadcast %7 : vector<1x256xf32> to vector<4x256xf32>
    %10 = arith.mulf %8, %9 : vector<4x256xf32>
    %11 = arith.addf %5, %10 : vector<4x256xf32>
    %c0_6 = arith.constant 0 : index
    %c1 = arith.constant 1 : index
    %12 = vector.load %arg3[%c0_6, %c1] : memref<4x4xf32, #tpu.memory_space<vmem>>, vector<4x1xf32>
    %13 = vector.extract_strided_slice %2 {offsets = [1, 0], sizes = [1, 256], strides = [1, 1]} : vector<4x256xf32> to vector<1x256xf32>
    %14 = vector.broadcast %12 : vector<4x1xf32> to vector<4x256xf32>
    %15 = vector.broadcast %13 : vector<1x256xf32> to vector<4x256xf32>
    %16 = arith.mulf %14, %15 : vector<4x256xf32>
    %17 = arith.addf %11, %16 : vector<4x256xf32>
    %c0_7 = arith.constant 0 : index
    %c2 = arith.constant 2 : index
    %18 = vector.load %arg3[%c0_7, %c2] : memref<4x4xf32, #tpu.memory_space<vmem>>, vector<4x1xf32>
    %19 = vector.extract_strided_slice %2 {offsets = [2, 0], sizes = [1, 256], strides = [1, 1]} : vector<4x256xf32> to vector<1x256xf32>
    %20 = vector.broadcast %18 : vector<4x1xf32> to vector<4x256xf32>
    %21 = vector.broadcast %19 : vector<1x256xf32> to vector<4x256xf32>
    %22 = arith.mulf %20, %21 : vector<4x256xf32>
    %23 = arith.addf %17, %22 : vector<4x256xf32>
    %c0_8 = arith.constant 0 : index
    %c3 = arith.constant 3 : index
    %24 = vector.load %arg3[%c0_8, %c3] : memref<4x4xf32, #tpu.memory_space<vmem>>, vector<4x1xf32>
    %25 = vector.extract_strided_slice %2 {offsets = [3, 0], sizes = [1, 256], strides = [1, 1]} : vector<4x256xf32> to vector<1x256xf32>
    %26 = vector.broadcast %24 : vector<4x1xf32> to vector<4x256xf32>
    %27 = vector.broadcast %25 : vector<1x256xf32> to vector<4x256xf32>
    %28 = arith.mulf %26, %27 : vector<4x256xf32>
    %29 = arith.addf %23, %28 : vector<4x256xf32>
    %30 = math.rsqrt %29 : vector<4x256xf32>
    %31 = arith.mulf %1, %30 : vector<4x256xf32>
    %c0_9 = arith.constant 0 : index
    %c0_10 = arith.constant 0 : index
    %c0_11 = arith.constant 0 : index
    %32 = vector.load %arg5[%c0_9, %c0_10, %c0_11] : memref<1x4x256xf32, #tpu.memory_space<vmem>>, vector<1x4x256xf32>
    %33 = vector.shape_cast %32 : vector<1x4x256xf32> to vector<4x256xf32>
    %34 = vector.shape_cast %31 : vector<4x256xf32> to vector<1x4x256xf32>
    tpu.vector_store %arg5[%c0_9, %c0_10, %c0_11], %34 {strides = array<i32>} : memref<1x4x256xf32, #tpu.memory_space<vmem>>, vector<1x4x256xf32>,
    return
  }
  func.func @transform_0(%arg0: i32, %arg1: i32) -> (i32, i32, i32) {
    %c0_i32 = arith.constant 0 : i32
    %c0_i32_0 = arith.constant 0 : i32
    return %arg0, %c0_i32, %arg1 : i32, i32, i32
  }
  func.func @transform_1(%arg0: i32, %arg1: i32) -> (i32, i32) {
    %c0_i32 = arith.constant 0 : i32
    %c0_i32_0 = arith.constant 0 : i32
    %c0_i32_1 = arith.constant 0 : i32
    return %c0_i32, %c0_i32_0 : i32, i32
  }
  func.func @transform_2(%arg0: i32, %arg1: i32) -> (i32, i32) {
    %c0_i32 = arith.constant 0 : i32
    %c0_i32_0 = arith.constant 0 : i32
    %c0_i32_1 = arith.constant 0 : i32
    return %c0_i32, %c0_i32_0 : i32, i32
  }
  func.func @transform_3(%arg0: i32, %arg1: i32) -> (i32, i32, i32) {
    %c0_i32 = arith.constant 0 : i32
    %c0_i32_0 = arith.constant 0 : i32
    return %arg0, %c0_i32, %arg1 : i32, i32, i32
  }
}

</mosaic_0001>

<llo_original>
// kernel: tpu_custom_call.1
$region0: #{tpu_custom_call.1}
  #allocation0 [shape = 'u32[]', space=smem, size = 0x4, offset = 0x4, fixed_abs, tag = 'smem constant byte address 0x4 - core index']
  #allocation1 [shape = 'u32[144,128]{1,0:T(1,128)}', space=vmem, size = 0x12000, scoped, tag = 'internal scratch']
  %s0 = inlined_call_operand.hbm [shape: f32[2,4,256], index: 0, kind: input, shape index: {}]
  %s1 = inlined_call_operand.vmem [shape: f32[4,4], index: 1, kind: input, shape index: {}]
  %s2 = inlined_call_operand.vmem [shape: f32[4,1], index: 2, kind: input, shape index: {}]
  %s3 = inlined_call_operand.hbm [shape: f32[2,4,256], index: 3, kind: output, shape index: {}]
  %s4 = sld [smem:[#allocation0]]
  $region49: #{tpu_custom_call.1} parent=0
    _
  %s6 = ssub.s32 1, %s4
  %s7 = scalar_select 0, %s6, %s4
  $region1: #{tpu_custom_call.1} parent=0
    #allocation2 [shape = 'u8[8192]{0}', space=vmem, size = 0x2000, scoped, tag = 'input window, operand 0']
    #allocation3 [shape = 's32[2]{0}', space=sflag, size = 0x8, scoped, tag = 'scoped memory for tpu_custom_call.1']
    #allocation4 [shape = 's32[2]{0}', space=sflag, size = 0x8, scoped, tag = 'scoped memory for tpu_custom_call.1']
    #allocation5 [shape = 'u8[8192]{0}', space=vmem, size = 0x2000, scoped, tag = 'output window, operand 0']
    %8 = vsyncpa [#allocation3], 0
    %s9 = scalar_lea.sflag [#allocation3], 1
    %10 = vsyncpa %s9, 0
    %11 = vsyncpa [#allocation4], 0
    %s12 = scalar_lea.sflag [#allocation4], 1
    %13 = vsyncpa %s12, 0
    loop: start=0, step=1, limit=4
    $region2: #{tpu_custom_call.1} parent=1 // loop_pre_header
      _
    $region3: #{tpu_custom_call.1} parent=1 // loop_header
      %s15 = sphi 0, %s19
      %p16 = scmp.ge.s32.totalorder %s15, 4
      %s22 = sphi 0, %s34
      %s23 = sphi 0, %s30
      %s24 = sphi 0, %s22
      %s25 = sphi 0, %s23
      %s26 = sphi 0, %s24
      %s27 = sphi 0, %s25
      %s39 = sphi 0, %s41
      %s42 = sphi 0, %s39
      %s43 = sphi 0, %s42
      %s59 = sphi 0, %s43
      %s63 = sphi 0, %s63
      %s65 = sphi 0, %s63
      %s66 = sphi 0, %s65
      %s80 = sphi 0, %s66
      %s84 = sphi 0, %s84
      %s86 = sphi 0, %s84
      %s87 = sphi 0, %s86
      %s101 = sphi 0, %s87
      %s109 = sphi 0, %s111
      %s112 = sphi 0, %s109
      %s113 = sphi 0, %s112
      %s129 = sphi 0, %s113
    $region4: #{tpu_custom_call.1} parent=1 // loop_header_branch
      %18 = sbr.rel (%p16) target = $region8
    $region5: #{tpu_custom_call.1} parent=1 // loop_body
      %s20 = ssub.s32 %s15, 1
      %s21 = ssub.s32 %s15, 2
      %s28 = sadd.s32 1, %s23
      %p29 = scmp.ge.s32.totalorder %s28, 1
      %s30 = scalar_select %p29, 0, %s28
      %s31 = sadd.s32 1, %s22
      %s32 = scalar_select %p29, %s31, %s22
      %p33 = scmp.ge.s32.totalorder %s32, 2
      %s34 = scalar_select %p33, 0, %s32
      %s35 = ssub.s32 %s22, %s34
      %s36 = ssub.s32 %s23, %s30
      %s37 = sor.u32 %s35, %s36
      %p38 = scmp.eq.s32.totalorder %s37, 0
      %s40 = sadd.s32 %s39, 1
      %s41 = scalar_select %p38, %s39, %s40
      %p44 = pneg %p38
      %p45 = scmp.eq.s32.totalorder %s15, 1
      %p46 = por %p44, %p45
      %p47 = scmp.ne.s32.totalorder %s39, %s42
      %p48 = scmp.eq.s32.totalorder %s15, 0
      %p49 = por %p47, %p48
      %p50 = scmp.ne.s32.totalorder %s39, %s42
      %p51 = scmp.eq.s32.totalorder %s20, 1
      %p52 = por %p50, %p51
      %p53 = scmp.ne.s32.totalorder %s42, %s43
      %p54 = scmp.eq.s32.totalorder %s20, 0
      %p55 = por %p53, %p54
      %p56 = scmp.ne.s32.totalorder %s42, %s43
      %p57 = scmp.eq.s32.totalorder %s21, 1
      %p58 = por %p56, %p57
      %p60 = scmp.ne.s32.totalorder %s43, %s59
      %p61 = scmp.eq.s32.totalorder %s21, 0
      %p62 = por %p60, %p61
      %s64 = sadd.s32 %s63, 1
      %p67 = scmp.eq.s32.totalorder %s15, 1
      %p68 = scmp.ne.s32.totalorder %s63, %s65
      %p69 = scmp.eq.s32.totalorder %s15, 0
      %p70 = por %p68, %p69
      %p71 = scmp.ne.s32.totalorder %s63, %s65
      %p72 = scmp.eq.s32.totalorder %s20, 1
      %p73 = por %p71, %p72
      %p74 = scmp.ne.s32.totalorder %s65, %s66
      %p75 = scmp.eq.s32.totalorder %s20, 0
      %p76 = por %p74, %p75
      %p77 = scmp.ne.s32.totalorder %s65, %s66
      %p78 = scmp.eq.s32.totalorder %s21, 1
      %p79 = por %p77, %p78
      %p81 = scmp.ne.s32.totalorder %s66, %s80
      %p82 = scmp.eq.s32.totalorder %s21, 0
      %p83 = por %p81, %p82
      %s85 = sadd.s32 %s84, 1
      %p88 = scmp.eq.s32.totalorder %s15, 1
      %p89 = scmp.ne.s32.totalorder %s84, %s86
      %p90 = scmp.eq.s32.totalorder %s15, 0
      %p91 = por %p89, %p90
      %p92 = scmp.ne.s32.totalorder %s84, %s86
      %p93 = scmp.eq.s32.totalorder %s20, 1
      %p94 = por %p92, %p93
      %p95 = scmp.ne.s32.totalorder %s86, %s87
      %p96 = scmp.eq.s32.totalorder %s20, 0
      %p97 = por %p95, %p96
      %p98 = scmp.ne.s32.totalorder %s86, %s87
      %p99 = scmp.eq.s32.totalorder %s21, 1
      %p100 = por %p98, %p99
      %p102 = scmp.ne.s32.totalorder %s87, %s101
      %p103 = scmp.eq.s32.totalorder %s21, 0
      %p104 = por %p102, %p103
      %s105 = ssub.s32 %s22, %s34
      %s106 = ssub.s32 %s23, %s30
      %s107 = sor.u32 %s105, %s106
      %p108 = scmp.eq.s32.totalorder %s107, 0
      %s110 = sadd.s32 %s109, 1
      %s111 = scalar_select %p108, %s109, %s110
      %p114 = pneg %p108
      %p115 = scmp.eq.s32.totalorder %s15, 1
      %p116 = por %p114, %p115
      %p117 = scmp.ne.s32.totalorder %s109, %s112
      %p118 = scmp.eq.s32.totalorder %s15, 0
      %p119 = por %p117, %p118
      %p120 = scmp.ne.s32.totalorder %s109, %s112
      %p121 = scmp.eq.s32.totalorder %s20, 1
      %p122 = por %p120, %p121
      %p123 = scmp.ne.s32.totalorder %s112, %s113
      %p124 = scmp.eq.s32.totalorder %s20, 0
      %p125 = por %p123, %p124
      %p126 = scmp.ne.s32.totalorder %s112, %s113
      %p127 = scmp.eq.s32.totalorder %s21, 1
      %p128 = por %p126, %p127
      %p130 = scmp.ne.s32.totalorder %s113, %s129
      %p131 = scmp.eq.s32.totalorder %s21, 0
      %p132 = por %p130, %p131
      %p133 = scmp.le.s32.totalorder 1, %s15
      %p134 = scmp.lt.s32.totalorder %s15, 3
      %p135 = pnand %p133, %p134
      %p136 = pneg %p135
      // Predicated region
      $region9: #{tpu_custom_call.1} parent=5 // pred_check
        _
      $region10: #{tpu_custom_call.1} parent=5 // pred_check_branch
        %138 = sbr.rel (%p135) target = $region12
      $region11: #{tpu_custom_call.1} parent=5 // pred_region
        %s139 = ssub.s32 %s15, 1
        // Predicated region
        $region13: #{tpu_custom_call.1} parent=11 // pred_check
          %p140 = pneg %p76
        $region14: #{tpu_custom_call.1} parent=11 // pred_check_branch
          %142 = sbr.rel (%p140) target = $region16
        $region15: #{tpu_custom_call.1} parent=11 // pred_region
          _
        $region16: #{tpu_custom_call.1} parent=11 // pred_fallthru
          _
        // Predicated region
        $region17: #{tpu_custom_call.1} parent=11 // pred_check
          %p143 = pneg %p97
        $region18: #{tpu_custom_call.1} parent=11 // pred_check_branch
          %145 = sbr.rel (%p143) target = $region20
        $region19: #{tpu_custom_call.1} parent=11 // pred_region
          _
        $region20: #{tpu_custom_call.1} parent=11 // pred_fallthru
          _
      $region12: #{tpu_custom_call.1} parent=5 // pred_fallthru
        _
      %p146 = scmp.lt.s32.totalorder %s15, 2
      // Predicated region
      $region21: #{tpu_custom_call.1} parent=5 // pred_check
        %p147 = pneg %p146
      $region22: #{tpu_custom_call.1} parent=5 // pred_check_branch
        %149 = sbr.rel (%p147) target = $region24
      $region23: #{tpu_custom_call.1} parent=5 // pred_region
        // Predicated region
        $region25: #{tpu_custom_call.1} parent=23 // pred_check
          %p150 = pneg %p49
        $region26: #{tpu_custom_call.1} parent=23 // pred_check_branch
          %152 = sbr.rel (%p150) target = $region28
        $region27: #{tpu_custom_call.1} parent=23 // pred_region
          %s153 = sand.u32 %s39, 1
          %s154 = scalar_lea.sflag [#allocation3], %s153
          %s155 = sand.u32 %s39, 1
          %s156 = smul.addr %s155, 8
          %s157 = scalar_lea.vmem [#allocation2], %s156
          %s158 = smul.u32 2, %s23
          %s160 = ssub.s32 128, 128
          %161 = vsyncadd %s154, %s160
          %s162 = smul.addr %s22, 2
          %s163 = sadd.s32 %s158, %s162
          %s164 = smul.addr %s163, 64
          %s165 = scalar_lea.hbm %s0, %s164
          %s167 = sshll.u32 %s157, 4
          %s168 = int_to_ptr.vmem [resolvable:$true] %s167
          %170 = dma.hbm_to_vmem [thread:$0]  %s165, 128, %s168, %s154
        $region28: #{tpu_custom_call.1} parent=23 // pred_fallthru
          _
      $region24: #{tpu_custom_call.1} parent=5 // pred_fallthru
        _
      %p171 = scmp.le.s32.totalorder 1, %s15
      %p172 = scmp.lt.s32.totalorder %s15, 3
      %p173 = pnand %p171, %p172
      %p174 = pneg %p173
      // Predicated region
      $region29: #{tpu_custom_call.1} parent=5 // pred_check
        _
      $region30: #{tpu_custom_call.1} parent=5 // pred_check_branch
        %176 = sbr.rel (%p173) target = $region32
      $region31: #{tpu_custom_call.1} parent=5 // pred_region
        %s177 = ssub.s32 %s15, 1
        %s178 = sand.u32 %s42, 1
        %s179 = scalar_lea.sflag [#allocation3], %s178
        %s180 = sand.u32 %s42, 1
        %s181 = smul.addr %s180, 8
        %s182 = scalar_lea.vmem [#allocation2], %s181
        // Predicated region
        $region33: #{tpu_custom_call.1} parent=31 // pred_check
          %p183 = pneg %p55
        $region34: #{tpu_custom_call.1} parent=31 // pred_check_branch
          %185 = sbr.rel (%p183) target = $region36
        $region35: #{tpu_custom_call.1} parent=31 // pred_region
          %186 = dma.done %s179, 128
        $region36: #{tpu_custom_call.1} parent=31 // pred_fallthru
          _
        %s187 = sand.u32 %s42, 1
        %s188 = scalar_lea.sflag [#allocation3], %s187
        %s189 = sand.u32 %s42, 1
        %s190 = smul.addr %s189, 8
        %s191 = scalar_lea.vmem [#allocation2], %s190
        %p192 = pneg %p55
        %p193 = pneg %p52
        %p194 = pneg %p76
        %p195 = pneg %p73
        %p196 = pneg %p97
        %p197 = pneg %p94
        %p198 = pneg %p125
        %p199 = pneg %p122
        %s200 = sand.u32 %s112, 1
        %s201 = scalar_lea.sflag [#allocation4], %s200
        %s202 = sand.u32 %s112, 1
        %s203 = smul.addr %s202, 8
        %s204 = scalar_lea.vmem [#allocation5], %s203
        %s205 = smul.u32 2, %s25
        %s206 = smul.u32 2, %s25
        %v207 = vld [vmem:[%s182] sm:$0xff]
        %v208 = vmul.f32 %v207, %v207
        %v209 = vld [vmem:[%s2] sm:$0xf]
        %211 = vset.pattern.permute.xlu0 0
        %212 = vperm.xlu0 %211, %v209
        %v213 = vpop.permute.xlu0 %212
        %v215 = vld [vmem:[%s1] sm:$0xf]
        %217 = vset.pattern.permute.xlu0 0
        %218 = vperm.xlu0 %217, %v215
        %v219 = vpop.permute.xlu0 %218
        %v222 = vlaneseq
        %v223 = vshrl.u32 %v222, 7
        %v224 = vsub.s32 0, %v223
        %v225 = vrot.slane %v208, %v224
        %v226 = vlaneseq
        %v227 = vshrl.u32 %v226, 7
        %v228 = vsub.s32 4, %v227
        %v229 = vrot.slane %v208, %v228
        %v232 = vlaneseq
        %v233 = vshrl.u32 %v232, 7
        %v234 = vsub.s32 0, %v233
        %v235 = vrot.slane %v225, %v234
        %v236 = vlaneseq
        %v237 = vshrl.u32 %v236, 7
        %v238 = vsub.s32 0, %v237
        %v239 = vrot.slane %v229, %v238
        %v240 = vmul.f32 %v219, %v235
        %v241 = vmul.f32 %v219, %v239
        %v242 = vadd.f32 %v213, %v240
        %v243 = vadd.f32 %v213, %v241
        %244 = vset.pattern.permute.xlu0 1
        %245 = vperm.xlu0 %244, %v215
        %v246 = vpop.permute.xlu0 %245
        %v248 = vlaneseq
        %v249 = vshrl.u32 %v248, 7
        %v250 = vsub.s32 1, %v249
        %v251 = vrot.slane %v208, %v250
        %v252 = vlaneseq
        %v253 = vshrl.u32 %v252, 7
        %v254 = vsub.s32 5, %v253
        %v255 = vrot.slane %v208, %v254
        %v258 = vlaneseq
        %v259 = vshrl.u32 %v258, 7
        %v260 = vsub.s32 1, %v259
        %v261 = vrot.slane %v251, %v260
        %v262 = vlaneseq
        %v263 = vshrl.u32 %v262, 7
        %v264 = vsub.s32 1, %v263
        %v265 = vrot.slane %v255, %v264
        %v266 = vmul.f32 %v246, %v261
        %v267 = vmul.f32 %v246, %v265
        %v268 = vadd.f32 %v242, %v266
        %v269 = vadd.f32 %v243, %v267
        %270 = vset.pattern.permute.xlu0 2
        %271 = vperm.xlu0 %270, %v215
        %v272 = vpop.permute.xlu0 %271
        %v274 = vlaneseq
        %v275 = vshrl.u32 %v274, 7
        %v276 = vsub.s32 2, %v275
        %v277 = vrot.slane %v208, %v276
        %v278 = vlaneseq
        %v279 = vshrl.u32 %v278, 7
        %v280 = vsub.s32 6, %v279
        %v281 = vrot.slane %v208, %v280
        %v284 = vlaneseq
        %v285 = vshrl.u32 %v284, 7
        %v286 = vsub.s32 2, %v285
        %v287 = vrot.slane %v277, %v286
        %v288 = vlaneseq
        %v289 = vshrl.u32 %v288, 7
        %v290 = vsub.s32 2, %v289
        %v291 = vrot.slane %v281, %v290
        %v292 = vmul.f32 %v272, %v287
        %v293 = vmul.f32 %v272, %v291
        %v294 = vadd.f32 %v268, %v292
        %v295 = vadd.f32 %v269, %v293
        %296 = vset.pattern.permute.xlu0 3
        %297 = vperm.xlu0 %296, %v215
        %v298 = vpop.permute.xlu0 %297
        %v300 = vlaneseq
        %v301 = vshrl.u32 %v300, 7
        %v302 = vsub.s32 3, %v301
        %v303 = vrot.slane %v208, %v302
        %v304 = vlaneseq
        %v305 = vshrl.u32 %v304, 7
        %v306 = vsub.s32 7, %v305
        %v307 = vrot.slane %v208, %v306
        %v310 = vlaneseq
        %v311 = vshrl.u32 %v310, 7
        %v312 = vsub.s32 3, %v311
        %v313 = vrot.slane %v303, %v312
        %v314 = vlaneseq
        %v315 = vshrl.u32 %v314, 7
        %v316 = vsub.s32 3, %v315
        %v317 = vrot.slane %v307, %v316
        %v318 = vmul.f32 %v298, %v313
        %v319 = vmul.f32 %v298, %v317
        %v320 = vadd.f32 %v294, %v318
        %v321 = vadd.f32 %v295, %v319
        %v322 = vrsqrt.pop %v320
        %v323 = vrsqrt.pop %v321
        %v326 = vcombine.low %v322, %v323
        %v328 = vmul.f32 %v207, %v326
        %329 = vst [vmem:[%s204] sm:$0xff] %v328
        %s330 = sand.u32 %s112, 1
        %s331 = scalar_lea.sflag [#allocation4], %s330
        %s332 = sand.u32 %s112, 1
        %s333 = smul.addr %s332, 8
        %s334 = scalar_lea.vmem [#allocation5], %s333
        // Predicated region
        $region37: #{tpu_custom_call.1} parent=31 // pred_check
          %p335 = pneg %p122
        $region38: #{tpu_custom_call.1} parent=31 // pred_check_branch
          %337 = sbr.rel (%p335) target = $region40
        $region39: #{tpu_custom_call.1} parent=31 // pred_region
          %s338 = smul.u32 2, %s25
          %s340 = ssub.s32 128, 128
          %341 = vsyncadd %s331, %s340
          %s342 = smul.addr %s24, 2
          %s343 = sadd.s32 %s338, %s342
          %s344 = smul.addr %s343, 64
          %s345 = scalar_lea.hbm %s3, %s344
          %s347 = sshll.u32 %s334, 4
          %s348 = int_to_ptr.vmem [resolvable:$true] %s347
          %350 = dma.vmem_to_hbm [thread:$0]  %s348, 128, %s345, %s331
        $region40: #{tpu_custom_call.1} parent=31 // pred_fallthru
          _
      $region32: #{tpu_custom_call.1} parent=5 // pred_fallthru
        _
      %p351 = scmp.le.s32.totalorder 2, %s15
      // Predicated region
      $region41: #{tpu_custom_call.1} parent=5 // pred_check
        %p352 = pneg %p351
      $region42: #{tpu_custom_call.1} parent=5 // pred_check_branch
        %354 = sbr.rel (%p352) target = $region44
      $region43: #{tpu_custom_call.1} parent=5 // pred_region
        %s355 = ssub.s32 %s15, 2
        // Predicated region
        $region45: #{tpu_custom_call.1} parent=43 // pred_check
          %p356 = pneg %p128
        $region46: #{tpu_custom_call.1} parent=43 // pred_check_branch
          %358 = sbr.rel (%p356) target = $region48
        $region47: #{tpu_custom_call.1} parent=43 // pred_region
          %s359 = sand.u32 %s113, 1
          %s360 = scalar_lea.sflag [#allocation4], %s359
          %s361 = sand.u32 %s113, 1
          %s362 = smul.addr %s361, 8
          %s363 = scalar_lea.vmem [#allocation5], %s362
          %364 = dma.done %s360, 128
        $region48: #{tpu_custom_call.1} parent=43 // pred_fallthru
          _
      $region44: #{tpu_custom_call.1} parent=5 // pred_fallthru
        _
    $region6: #{tpu_custom_call.1} parent=1 // loop_footer
      %s19 = sadd.s32 1, %s15
    $region7: #{tpu_custom_call.1} parent=1 // loop_footer_branch
      %14 = sbr.rel target = $region3
    $region8: #{tpu_custom_call.1} parent=1 // loop_exit
      _
    %365 = vsyncpa [#allocation3], 1
    %s366 = scalar_lea.sflag [#allocation3], 1
    %367 = vsyncpa %s366, 1
    %368 = vsyncpa [#allocation4], 1
    %s369 = scalar_lea.sflag [#allocation4], 1
    %370 = vsyncpa %s369, 1

</llo_original>
